<compile_context>
chip_gen: v7x
topology: tpu7x:2x2x1
jax: 0.10.0
libtpu: 0.0.40
codegen_flags: <defaults>
</compile_context>

<pallas_src>
import functools

import jax
import jax.numpy as jnp
from jax.experimental import pallas as pl
from jax.experimental.pallas import tpu as pltpu


def dqn_kernel(x_ref, w1_ref, b1_ref, w2_ref, b2_ref, w3_ref, b3_ref, o_ref):
    # Transposed problem: rows = features (sublanes), columns = batch (lanes).
    # 3 MXU matmuls (f32 accumulation) + VPU bias/relu in f32. The MXU is a
    # negligible fraction of a pass here; the binding resource is load/store
    # layout, which the transposed lane-dense tiles address.
    xT = x_ref[...]
    h1 = jnp.dot(w1_ref[...], xT, preferred_element_type=jnp.float32) + b1_ref[...]
    h1 = jnp.maximum(h1, 0.0).astype(x_ref.dtype)          # relu(fc1)
    h2 = jnp.dot(w2_ref[...], h1, preferred_element_type=jnp.float32) + b2_ref[...]
    h2 = jnp.maximum(h2, 0.0).astype(x_ref.dtype)          # relu(fc2)
    yT = jnp.dot(w3_ref[...], h2, preferred_element_type=jnp.float32) + b3_ref[...]
    o_ref[...] = yT.astype(o_ref.dtype)


def _dqn_forward_small(xT, weights, biases):
    """No grid, no pipeline machinery: every operand is a plain VMEM operand."""
    w1, w2, w3 = weights
    b1, b2, b3 = biases
    out_dim, B = w3.shape[0], xT.shape[1]
    vmem = pl.BlockSpec(memory_space=pltpu.MemorySpace.VMEM)
    return pl.pallas_call(
        dqn_kernel,
        out_shape=jax.ShapeDtypeStruct((out_dim, B), jnp.float32),
        in_specs=[vmem] * 7,
        out_specs=vmem,
    )(xT, w1, b1, w2, b2, w3, b3)


def _choose_tile(B, target_tile):
    """Lane-aligned batch tile with an even grid-step count (dual-TC balance)."""
    nb = pl.cdiv(B, target_tile)
    if nb > 1 and nb % 2 == 1:
        nb += 1                                   # even split across v7x's 2 TCs
    tile_b = pl.cdiv(B, nb)
    tile_b = ((tile_b + 127) // 128) * 128        # multiple of 128 lanes
    nb = pl.cdiv(B, tile_b)
    return tile_b, nb


def _dqn_forward_tiled(xT, weights, biases, target_tile):
    """Batch-tiled path: weights VMEM-resident, xT/outT streamed per lane tile."""
    w1, w2, w3 = weights
    b1, b2, b3 = biases
    in_dim, B = xT.shape
    out_dim = w3.shape[0]

    tile_b, nb = _choose_tile(B, target_tile)

    def resident(a):
        # Same block every grid step -> stays resident in VMEM.
        return pl.BlockSpec(a.shape, lambda i: (0,) * a.ndim)

    # VMEM per step (transposed layout, tile_b=8192, f32 worst case):
    # xT block ~256 KiB, outT block ~256 KiB (double-buffered ~1 MiB total),
    # h1/h2 temps ~1.5 MiB, weights <10 KiB -> well inside every generation's
    # default scoped VMEM limit (incl. v7x's 32 MiB default / 64 MiB physical).
    return pl.pallas_call(
        dqn_kernel,
        out_shape=jax.ShapeDtypeStruct((out_dim, B), jnp.float32),
        grid=(nb,),
        in_specs=[
            pl.BlockSpec((in_dim, tile_b), lambda i: (0, i)),   # streamed x^T
            resident(w1), resident(b1),
            resident(w2), resident(b2),
            resident(w3), resident(b3),
        ],
        # Ragged last block: Pallas masks out-of-range lane stores, and each
        # output column depends only on its own input column, so no wrapper-side
        # pad / slice round-trip (and no extra HBM traffic) is needed.
        out_specs=pl.BlockSpec((out_dim, tile_b), lambda i: (0, i)),
        compiler_params=pltpu.CompilerParams(
            dimension_semantics=("parallel",)),   # shards batch tiles across TCs
    )(xT, w1, b1, w2, b2, w3, b3)


def dqn_forward(x, params, *, compute_dtype=jnp.bfloat16,
                small_cutoff=4096, target_tile=8192):
    """x: (batch, input_dim) as in torch. Returns (batch, output_dim) f32."""
    w1, b1, w2, b2, w3, b3 = params
    B = x.shape[0]
    # Layout plumbing: batch onto the lane axis; matmul inputs in compute_dtype.
    xT = x.T.astype(compute_dtype)
    weights = tuple(w.astype(compute_dtype) for w in (w1, w2, w3))
    biases = (b1, b2, b3)                      # biases stay f32 (VPU add/relu in f32)
    if B <= small_cutoff:
        outT = _dqn_forward_small(xT, weights, biases)
    else:
        outT = _dqn_forward_tiled(xT, weights, biases, target_tile)
    return outT.T                              # back to (batch, output_dim)


def init_params(key, input_dim, output_dim, hidden=24):
    # torch.nn.Linear default init: U(-1/sqrt(fan_in), +1/sqrt(fan_in)),
    # stored torch-native: W (out_features, in_features), b (out_features, 1).
    def linear(key, fan_in, fan_out):
        kw, kb = jax.random.split(key)
        bound = 1.0 / jnp.sqrt(float(fan_in))
        w = jax.random.uniform(kw, (fan_out, fan_in), jnp.float32, -bound, bound)
        b = jax.random.uniform(kb, (fan_out, 1), jnp.float32, -bound, bound)
        return w, b

    k1, k2, k3 = jax.random.split(key, 3)
    w1, b1 = linear(k1, input_dim, hidden)
    w2, b2 = linear(k2, hidden, hidden)
    w3, b3 = linear(k3, hidden, output_dim)
    return (w1, b1, w2, b2, w3, b3)


def _reference(x, params):
    w1, b1, w2, b2, w3, b3 = params
    h = jnp.maximum(x @ w1.T + b1.T, 0.0)
    h = jnp.maximum(h @ w2.T + b2.T, 0.0)
    return h @ w3.T + b3.T


if __name__ == "__main__":
    key = jax.random.PRNGKey(0)
    kx, kp, kbig = jax.random.split(key, 3)

    batch, input_dim, output_dim = 8, 4, 2            # CartPole-like DQN
    x = jax.random.normal(kx, (batch, input_dim), jnp.float32)
    params = init_params(kp, input_dim, output_dim)
    ref_small = _reference(x, params)

    # --- small-batch path (no grid), exact f32 and default bf16 compute ---
    fwd_small_f32 = jax.jit(functools.partial(dqn_forward, compute_dtype=jnp.float32))
    out_f32 = jax.block_until_ready(fwd_small_f32(x, params))
    assert out_f32.shape == (batch, output_dim)
    assert jnp.allclose(out_f32, ref_small, atol=1e-5), "small-batch f32 mismatch"

    fwd_small_bf16 = jax.jit(functools.partial(dqn_forward, compute_dtype=jnp.bfloat16))
    out_bf16 = jax.block_until_ready(fwd_small_bf16(x, params))
    assert jnp.allclose(out_bf16, ref_small, atol=5e-2), "small-batch bf16 mismatch"

    # --- tiled path: ragged batch, even grid-step count, resident weights ---
    big_b = 5000                                      # non-multiple of the lane tile
    x_big = jax.random.normal(kbig, (big_b, input_dim), jnp.float32)
    ref_big = _reference(x_big, params)

    fwd_tiled_f32 = jax.jit(functools.partial(
        dqn_forward, compute_dtype=jnp.float32, small_cutoff=1024, target_tile=2048))
    out_big_f32 = jax.block_until_ready(fwd_tiled_f32(x_big, params))
    assert out_big_f32.shape == (big_b, output_dim)
    assert jnp.allclose(out_big_f32, ref_big, atol=1e-4), "tiled f32 mismatch"

    fwd_tiled_bf16 = jax.jit(functools.partial(
        dqn_forward, compute_dtype=jnp.bfloat16, small_cutoff=1024, target_tile=2048))
    out_big_bf16 = jax.block_until_ready(fwd_tiled_bf16(x_big, params))
    assert jnp.allclose(out_big_bf16, ref_big, atol=5e-2), "tiled bf16 mismatch"

    print("KERNEL_OK")
</pallas_src>

<mosaic_0001>
module attributes {stable_mosaic.version = 11 : i64} {
  func.func @dqn_kernel(%arg0: memref<4x8xf32, #tpu.memory_space<vmem>>, %arg1: memref<24x4xf32, #tpu.memory_space<vmem>>, %arg2: memref<24x1xf32, #tpu.memory_space<vmem>>, %arg3: memref<24x24xf32, #tpu.memory_space<vmem>>, %arg4: memref<24x1xf32, #tpu.memory_space<vmem>>, %arg5: memref<2x24xf32, #tpu.memory_space<vmem>>, %arg6: memref<2x1xf32, #tpu.memory_space<vmem>>, %arg7: memref<2x8xf32, #tpu.memory_space<vmem>>) attributes {dimension_semantics = [], scalar_prefetch = 0 : i64, scratch_operands = 0 : i64, tpu.core_type = #tpu.core_type<tc>} {
    %c0 = arith.constant 0 : index
    %c0_0 = arith.constant 0 : index
    %0 = vector.load %arg0[%c0, %c0_0] : memref<4x8xf32, #tpu.memory_space<vmem>>, vector<4x8xf32>
    %c0_1 = arith.constant 0 : index
    %c0_2 = arith.constant 0 : index
    %1 = vector.load %arg1[%c0_1, %c0_2] : memref<24x4xf32, #tpu.memory_space<vmem>>, vector<24x4xf32>
    %cst = arith.constant dense<0.000000e+00> : vector<24x8xf32>
    %2 = tpu.matmul %1, %0, %cst {dimension_numbers = #tpu.dot_dimension_numbers<[1], [0], [0], [1], [0, 0, 1, 1], [], []>} : vector<24x4xf32>, vector<4x8xf32>, vector<24x8xf32> -> vector<24x8xf32>
    %c0_3 = arith.constant 0 : index
    %c0_4 = arith.constant 0 : index
    %3 = vector.load %arg2[%c0_3, %c0_4] : memref<24x1xf32, #tpu.memory_space<vmem>>, vector<24x1xf32>
    %4 = vector.broadcast %3 : vector<24x1xf32> to vector<24x8xf32>
    %5 = arith.addf %2, %4 : vector<24x8xf32>
    %cst_5 = arith.constant 0.000000e+00 : f32
    %6 = vector.broadcast %cst_5 : f32 to vector<24x8xf32>
    %7 = arith.maximumf %5, %6 : vector<24x8xf32>
    %c0_6 = arith.constant 0 : index
    %c0_7 = arith.constant 0 : index
    %8 = vector.load %arg3[%c0_6, %c0_7] : memref<24x24xf32, #tpu.memory_space<vmem>>, vector<24x24xf32>
    %cst_8 = arith.constant dense<0.000000e+00> : vector<24x8xf32>
    %9 = tpu.matmul %8, %7, %cst_8 {dimension_numbers = #tpu.dot_dimension_numbers<[1], [0], [0], [1], [0, 0, 1, 1], [], []>} : vector<24x24xf32>, vector<24x8xf32>, vector<24x8xf32> -> vector<24x8xf32>
    %c0_9 = arith.constant 0 : index
    %c0_10 = arith.constant 0 : index
    %10 = vector.load %arg4[%c0_9, %c0_10] : memref<24x1xf32, #tpu.memory_space<vmem>>, vector<24x1xf32>
    %11 = vector.broadcast %10 : vector<24x1xf32> to vector<24x8xf32>
    %12 = arith.addf %9, %11 : vector<24x8xf32>
    %cst_11 = arith.constant 0.000000e+00 : f32
    %13 = vector.broadcast %cst_11 : f32 to vector<24x8xf32>
    %14 = arith.maximumf %12, %13 : vector<24x8xf32>
    %c0_12 = arith.constant 0 : index
    %c0_13 = arith.constant 0 : index
    %15 = vector.load %arg5[%c0_12, %c0_13] : memref<2x24xf32, #tpu.memory_space<vmem>>, vector<2x24xf32>
    %cst_14 = arith.constant dense<0.000000e+00> : vector<2x8xf32>
    %16 = tpu.matmul %15, %14, %cst_14 {dimension_numbers = #tpu.dot_dimension_numbers<[1], [0], [0], [1], [0, 0, 1, 1], [], []>} : vector<2x24xf32>, vector<24x8xf32>, vector<2x8xf32> -> vector<2x8xf32>
    %c0_15 = arith.constant 0 : index
    %c0_16 = arith.constant 0 : index
    %17 = vector.load %arg6[%c0_15, %c0_16] : memref<2x1xf32, #tpu.memory_space<vmem>>, vector<2x1xf32>
    %18 = vector.broadcast %17 : vector<2x1xf32> to vector<2x8xf32>
    %19 = arith.addf %16, %18 : vector<2x8xf32>
    %c0_17 = arith.constant 0 : index
    %c0_18 = arith.constant 0 : index
    %20 = vector.load %arg7[%c0_17, %c0_18] : memref<2x8xf32, #tpu.memory_space<vmem>>, vector<2x8xf32>
    tpu.vector_store %arg7[%c0_17, %c0_18], %19 {strides = array<i32>} : memref<2x8xf32, #tpu.memory_space<vmem>>, vector<2x8xf32>,
    return
  }
}

</mosaic_0001>

<llo_original>
// kernel: dqn_forward.1
$region0: #{dqn_forward.1}
  #allocation0 [shape = 'u32[]', space=smem, size = 0x4, offset = 0x4, fixed_abs, tag = 'smem constant byte address 0x4 - core index']
  #allocation1 [shape = 'u32[144,128]{1,0:T(1,128)}', space=vmem, size = 0x12000, scoped, tag = 'internal scratch']
  %s0 = inlined_call_operand.vmem [shape: f32[4,8], index: 0, kind: input, shape index: {}]
  %s1 = inlined_call_operand.vmem [shape: f32[24,4], index: 1, kind: input, shape index: {}]
  %s2 = inlined_call_operand.vmem [shape: f32[24,1], index: 2, kind: input, shape index: {}]
  %s3 = inlined_call_operand.vmem [shape: f32[24,24], index: 3, kind: input, shape index: {}]
  %s4 = inlined_call_operand.vmem [shape: f32[24,1], index: 4, kind: input, shape index: {}]
  %s5 = inlined_call_operand.vmem [shape: f32[2,24], index: 5, kind: input, shape index: {}]
  %s6 = inlined_call_operand.vmem [shape: f32[2,1], index: 6, kind: input, shape index: {}]
  %s7 = inlined_call_operand.hbm [shape: f32[2,8], index: 7, kind: output, shape index: {}]
  %s8 = sld [smem:[#allocation0]]
  $region38: #{dqn_forward.1} parent=0
    _
  %s10 = ssub.s32 1, %s8
  %s11 = scalar_select 0, %s10, %s8
  $region1: #{dqn_forward.1} parent=0
    #allocation2 [shape = 'u8[1024]{0}', space=vmem, size = 0x400, scoped, tag = 'output window, operand 0, single buffered']
    #allocation3 [shape = 's32[1]{0}', space=sflag, size = 0x4, scoped, tag = 'scoped memory for dqn_forward.1']
    %12 = vsyncpa [#allocation3], 0
    // Predicated region
    $region2: #{dqn_forward.1} parent=1 // pred_check
      _
    $region3: #{dqn_forward.1} parent=1 // pred_check_branch
      %14 = sbr.rel (0) target = $region5
    $region4: #{dqn_forward.1} parent=1 // pred_region
      _
    $region5: #{dqn_forward.1} parent=1 // pred_fallthru
      _
    // Predicated region
    $region6: #{dqn_forward.1} parent=1 // pred_check
      _
    $region7: #{dqn_forward.1} parent=1 // pred_check_branch
      %16 = sbr.rel (0) target = $region9
    $region8: #{dqn_forward.1} parent=1 // pred_region
      _
    $region9: #{dqn_forward.1} parent=1 // pred_fallthru
      _
    // Predicated region
    $region10: #{dqn_forward.1} parent=1 // pred_check
      _
    $region11: #{dqn_forward.1} parent=1 // pred_check_branch
      %18 = sbr.rel (0) target = $region13
    $region12: #{dqn_forward.1} parent=1 // pred_region
      _
    $region13: #{dqn_forward.1} parent=1 // pred_fallthru
      _
    // Predicated region
    $region14: #{dqn_forward.1} parent=1 // pred_check
      _
    $region15: #{dqn_forward.1} parent=1 // pred_check_branch
      %20 = sbr.rel (0) target = $region17
    $region16: #{dqn_forward.1} parent=1 // pred_region
      _
    $region17: #{dqn_forward.1} parent=1 // pred_fallthru
      _
    // Predicated region
    $region18: #{dqn_forward.1} parent=1 // pred_check
      _
    $region19: #{dqn_forward.1} parent=1 // pred_check_branch
      %22 = sbr.rel (0) target = $region21
    $region20: #{dqn_forward.1} parent=1 // pred_region
      _
    $region21: #{dqn_forward.1} parent=1 // pred_fallthru
      _
    // Predicated region
    $region22: #{dqn_forward.1} parent=1 // pred_check
      _
    $region23: #{dqn_forward.1} parent=1 // pred_check_branch
      %24 = sbr.rel (0) target = $region25
    $region24: #{dqn_forward.1} parent=1 // pred_region
      _
    $region25: #{dqn_forward.1} parent=1 // pred_fallthru
      _
    // Predicated region
    $region26: #{dqn_forward.1} parent=1 // pred_check
      _
    $region27: #{dqn_forward.1} parent=1 // pred_check_branch
      %26 = sbr.rel (0) target = $region29
    $region28: #{dqn_forward.1} parent=1 // pred_region
      _
    $region29: #{dqn_forward.1} parent=1 // pred_fallthru
      _
    %v27 = vld [vmem:[%s0] sm:$0xf]
    %v28 = vld [vmem:[%s1] sm:$0xff]
    %v29 = vld [vmem:[%s1 + $0x8] sm:$0xff]
    %v30 = vld [vmem:[%s1 + $0x10] sm:$0xff]
    %v31 = vld [vmem:[%s2] sm:$0xff]
    %v32 = vld [vmem:[%s2 + $0x8] sm:$0xff]
    %v33 = vld [vmem:[%s2 + $0x10] sm:$0xff]
    %35 = vset.pattern.permute.xlu0 0
    %36 = vperm.xlu0 %35, %v31
    %v37 = vpop.permute.xlu0 %36
    %40 = vset.pattern.permute.xlu0 0
    %41 = vperm.xlu0 %40, %v32
    %v42 = vpop.permute.xlu0 %41
    %45 = vset.pattern.permute.xlu0 0
    %46 = vperm.xlu0 %45, %v33
    %v47 = vpop.permute.xlu0 %46
    %vm49 = vcmask 31744
    %v51 = vsel %vm49, %v28, 0
    %v54 = vsel %vm49, %v29, 0
    %v57 = vsel %vm49, %v30, 0
    %vm59 = vcmask 1043456
    %v61 = vsel %vm59, %v27, 0
    %63 = vmatprep.subr.mxu0 0.0
    %64 = vmatpush1.msra.mxu0 %v61
    %65 = vmatprep.subr.mxu0 0.0
    %66 = vmatpush1.msra.mxu0 0.0
    %67 = vmatprep.subr.mxu0 0.0
    %68 = vmatpush1.msra.mxu0 0.0
    %69 = vmatprep.subr.mxu0 0.0
    %70 = vmatpush1.msra.mxu0 0.0
    %71 = vmatprep.subr.mxu0 0.0
    %72 = vmatpush1.msra.mxu0 0.0
    %73 = vmatprep.subr.mxu0 0.0
    %74 = vmatpush1.msra.mxu0 0.0
    %75 = vmatprep.subr.mxu0 0.0
    %76 = vmatpush1.msra.mxu0 0.0
    %77 = vmatprep.subr.mxu0 0.0
    %78 = vmatpush1.msra.mxu0 0.0
    %79 = vmatprep.subr.mxu0 0.0
    %80 = vmatpush1.msra.mxu0 0.0
    %81 = vmatprep.subr.mxu0 0.0
    %82 = vmatpush1.msra.mxu0 0.0
    %83 = vmatprep.subr.mxu0 0.0
    %84 = vmatpush1.msra.mxu0 0.0
    %85 = vmatprep.subr.mxu0 0.0
    %86 = vmatpush1.msra.mxu0 0.0
    %87 = vmatprep.subr.mxu0 0.0
    %88 = vmatpush1.msra.mxu0 0.0
    %89 = vmatprep.subr.mxu0 0.0
    %90 = vmatpush1.msra.mxu0 0.0
    %91 = vmatprep.subr.mxu0 0.0
    %92 = vmatpush1.msra.mxu0 0.0
    %93 = vmatprep.subr.mxu0 0.0
    %94 = vmatpush1.msra.mxu0 0.0
    %95 = vmatprep.subr.mxu0 0.0
    %96 = vmatpush1.msra.mxu0 0.0
    %97 = vmatprep.subr.mxu0 0.0
    %98 = vmatpush1.msra.mxu0 0.0
    %99 = vmatprep.subr.mxu0 0.0
    %100 = vmatpush1.msra.mxu0 0.0
    %101 = vmatprep.subr.mxu0 0.0
    %102 = vmatpush1.msra.mxu0 0.0
    %103 = vmatprep.subr.mxu0 0.0
    %104 = vmatpush1.msra.mxu0 0.0
    %105 = vmatprep.subr.mxu0 0.0
    %106 = vmatpush1.msra.mxu0 0.0
    %107 = vmatprep.subr.mxu0 0.0
    %108 = vmatpush1.msra.mxu0 0.0
    %109 = vmatprep.subr.mxu0 0.0
    %110 = vmatpush1.msra.mxu0 0.0
    %111 = vmatprep.subr.mxu0 0.0
    %112 = vmatpush1.msra.mxu0 0.0
    %113 = vmatprep.subr.mxu0 0.0
    %114 = vmatpush1.msra.mxu0 0.0
    %115 = vmatprep.subr.mxu0 0.0
    %116 = vmatpush1.msra.mxu0 0.0
    %117 = vmatprep.subr.mxu0 0.0
    %118 = vmatpush1.msra.mxu0 0.0
    %119 = vmatprep.subr.mxu0 0.0
    %120 = vmatpush1.msra.mxu0 0.0
    %121 = vmatprep.subr.mxu0 0.0
    %122 = vmatpush1.msra.mxu0 0.0
    %123 = vmatprep.subr.mxu0 0.0
    %124 = vmatpush1.msra.mxu0 0.0
    %125 = vmatprep.subr.mxu0 0.0
    %126 = vmatpush1.msra.mxu0 0.0
    %127 = vmatprep.mubr.f32.mxu0 0.0
    %128 = vmatmul.mubr.f32.gmra.mrb[0].mxu0 %v51
    %v129 = vpop.f32.mrb[0].mxu0
    %v130 = vadd.f32 %v37, %v129
    %v131 = vpop.f32.mrb[0].mxu0
    %132 = vmatprep.mubr.f32.mxu0 0.0
    %133 = vmatmul.mubr.f32.gmra.mrb[0].mxu0 %v54
    %v134 = vpop.f32.mrb[0].mxu0
    %v135 = vadd.f32 %v42, %v134
    %v136 = vpop.f32.mrb[0].mxu0
    %137 = vmatprep.mubr.f32.mxu0 0.0
    %138 = vmatmul.mubr.f32.gmra.mrb[0].mxu0 %v57
    %v139 = vpop.f32.mrb[0].mxu0
    %v140 = vadd.f32 %v47, %v139
    %v141 = vpop.f32.mrb[0].mxu0
    %142 = vdwg.mxu0
    %v143 = vmax.f32 %v130, 0.0
    %v144 = vmax.f32 %v135, 0.0
    %v145 = vmax.f32 %v140, 0.0
    %v146 = vld [vmem:[%s3] sm:$0xff]
    %v147 = vld [vmem:[%s3 + $0x8] sm:$0xff]
    %v148 = vld [vmem:[%s3 + $0x10] sm:$0xff]
    %v149 = vld [vmem:[%s4] sm:$0xff]
    %v150 = vld [vmem:[%s4 + $0x8] sm:$0xff]
    %v151 = vld [vmem:[%s4 + $0x10] sm:$0xff]
    %153 = vset.pattern.permute.xlu0 0
    %154 = vperm.xlu0 %153, %v149
    %v155 = vpop.permute.xlu0 %154
    %158 = vset.pattern.permute.xlu0 0
    %159 = vperm.xlu0 %158, %v150
    %v160 = vpop.permute.xlu0 %159
    %163 = vset.pattern.permute.xlu0 0
    %164 = vperm.xlu0 %163, %v151
    %v165 = vpop.permute.xlu0 %164
    %vm167 = vcmask 195584
    %v169 = vsel %vm167, %v146, 0
    %v172 = vsel %vm167, %v147, 0
    %v175 = vsel %vm167, %v148, 0
    %177 = vmatprep.subr.mxu0 0.0
    %178 = vmatpush1.msra.mxu0 %v143
    %179 = vmatprep.subr.mxu0 0.0
    %180 = vmatpush1.msra.mxu0 %v144
    %181 = vmatprep.subr.mxu0 0.0
    %182 = vmatpush1.msra.mxu0 %v145
    %183 = vmatprep.subr.mxu0 0.0
    %184 = vmatpush1.msra.mxu0 0.0
    %185 = vmatprep.subr.mxu0 0.0
    %186 = vmatpush1.msra.mxu0 0.0
    %187 = vmatprep.subr.mxu0 0.0
    %188 = vmatpush1.msra.mxu0 0.0
    %189 = vmatprep.subr.mxu0 0.0
    %190 = vmatpush1.msra.mxu0 0.0
    %191 = vmatprep.subr.mxu0 0.0
    %192 = vmatpush1.msra.mxu0 0.0
    %193 = vmatprep.subr.mxu0 0.0
    %194 = vmatpush1.msra.mxu0 0.0
    %195 = vmatprep.subr.mxu0 0.0
    %196 = vmatpush1.msra.mxu0 0.0
    %197 = vmatprep.subr.mxu0 0.0
    %198 = vmatpush1.msra.mxu0 0.0
    %199 = vmatprep.subr.mxu0 0.0
    %200 = vmatpush1.msra.mxu0 0.0
    %201 = vmatprep.subr.mxu0 0.0
    %202 = vmatpush1.msra.mxu0 0.0
    %203 = vmatprep.subr.mxu0 0.0
    %204 = vmatpush1.msra.mxu0 0.0
    %205 = vmatprep.subr.mxu0 0.0
    %206 = vmatpush1.msra.mxu0 0.0
    %207 = vmatprep.subr.mxu0 0.0
    %208 = vmatpush1.msra.mxu0 0.0
    %209 = vmatprep.subr.mxu0 0.0
    %210 = vmatpush1.msra.mxu0 0.0
    %211 = vmatprep.subr.mxu0 0.0
    %212 = vmatpush1.msra.mxu0 0.0
    %213 = vmatprep.subr.mxu0 0.0
    %214 = vmatpush1.msra.mxu0 0.0
    %215 = vmatprep.subr.mxu0 0.0
    %216 = vmatpush1.msra.mxu0 0.0
    %217 = vmatprep.subr.mxu0 0.0
    %218 = vmatpush1.msra.mxu0 0.0
    %219 = vmatprep.subr.mxu0 0.0
    %220 = vmatpush1.msra.mxu0 0.0
    %221 = vmatprep.subr.mxu0 0.0
    %222 = vmatpush1.msra.mxu0 0.0
    %223 = vmatprep.subr.mxu0 0.0
    %224 = vmatpush1.msra.mxu0 0.0
    %225 = vmatprep.subr.mxu0 0.0
    %226 = vmatpush1.msra.mxu0 0.0
    %227 = vmatprep.subr.mxu0 0.0
    %228 = vmatpush1.msra.mxu0 0.0
    %229 = vmatprep.subr.mxu0 0.0
    %230 = vmatpush1.msra.mxu0 0.0
    %231 = vmatprep.subr.mxu0 0.0
    %232 = vmatpush1.msra.mxu0 0.0
    %233 = vmatprep.subr.mxu0 0.0
    %234 = vmatpush1.msra.mxu0 0.0
    %235 = vmatprep.subr.mxu0 0.0
    %236 = vmatpush1.msra.mxu0 0.0
    %237 = vmatprep.subr.mxu0 0.0
    %238 = vmatpush1.msra.mxu0 0.0
    %239 = vmatprep.subr.mxu0 0.0
    %240 = vmatpush1.msra.mxu0 0.0
    %241 = vmatprep.mubr.f32.mxu0 0.0
    %242 = vmatmul.mubr.f32.gmra.mrb[0].mxu0 %v169
    %v243 = vpop.f32.mrb[0].mxu0
    %v244 = vadd.f32 %v155, %v243
    %v245 = vpop.f32.mrb[0].mxu0
    %246 = vmatprep.mubr.f32.mxu0 0.0
    %247 = vmatmul.mubr.f32.gmra.mrb[0].mxu0 %v172
    %v248 = vpop.f32.mrb[0].mxu0
    %v249 = vadd.f32 %v160, %v248
    %v250 = vpop.f32.mrb[0].mxu0
    %251 = vmatprep.mubr.f32.mxu0 0.0
    %252 = vmatmul.mubr.f32.gmra.mrb[0].mxu0 %v175
    %v253 = vpop.f32.mrb[0].mxu0
    %v254 = vadd.f32 %v165, %v253
    %v255 = vpop.f32.mrb[0].mxu0
    %256 = vdwg.mxu0
    %v257 = vmax.f32 %v244, 0.0
    %v258 = vmax.f32 %v249, 0.0
    %v259 = vmax.f32 %v254, 0.0
    %v260 = vld [vmem:[%s5] sm:$0x3]
    %v261 = vld [vmem:[%s6] sm:$0x3]
    %263 = vset.pattern.permute.xlu0 0
    %264 = vperm.xlu0 %263, %v261
    %v265 = vpop.permute.xlu0 %264
    %v268 = vsel %vm167, %v260, 0
    %270 = vmatprep.subr.mxu0 0.0
    %271 = vmatpush1.msra.mxu0 %v257
    %272 = vmatprep.subr.mxu0 0.0
    %273 = vmatpush1.msra.mxu0 %v258
    %274 = vmatprep.subr.mxu0 0.0
    %275 = vmatpush1.msra.mxu0 %v259
    %276 = vmatprep.subr.mxu0 0.0
    %277 = vmatpush1.msra.mxu0 0.0
    %278 = vmatprep.subr.mxu0 0.0
    %279 = vmatpush1.msra.mxu0 0.0
    %280 = vmatprep.subr.mxu0 0.0
    %281 = vmatpush1.msra.mxu0 0.0
    %282 = vmatprep.subr.mxu0 0.0
    %283 = vmatpush1.msra.mxu0 0.0
    %284 = vmatprep.subr.mxu0 0.0
    %285 = vmatpush1.msra.mxu0 0.0
    %286 = vmatprep.subr.mxu0 0.0
    %287 = vmatpush1.msra.mxu0 0.0
    %288 = vmatprep.subr.mxu0 0.0
    %289 = vmatpush1.msra.mxu0 0.0
    %290 = vmatprep.subr.mxu0 0.0
    %291 = vmatpush1.msra.mxu0 0.0
    %292 = vmatprep.subr.mxu0 0.0
    %293 = vmatpush1.msra.mxu0 0.0
    %294 = vmatprep.subr.mxu0 0.0
    %295 = vmatpush1.msra.mxu0 0.0
    %296 = vmatprep.subr.mxu0 0.0
    %297 = vmatpush1.msra.mxu0 0.0
    %298 = vmatprep.subr.mxu0 0.0
    %299 = vmatpush1.msra.mxu0 0.0
    %300 = vmatprep.subr.mxu0 0.0
    %301 = vmatpush1.msra.mxu0 0.0
    %302 = vmatprep.subr.mxu0 0.0
    %303 = vmatpush1.msra.mxu0 0.0
    %304 = vmatprep.subr.mxu0 0.0
    %305 = vmatpush1.msra.mxu0 0.0
    %306 = vmatprep.subr.mxu0 0.0
    %307 = vmatpush1.msra.mxu0 0.0
    %308 = vmatprep.subr.mxu0 0.0
    %309 = vmatpush1.msra.mxu0 0.0
    %310 = vmatprep.subr.mxu0 0.0
    %311 = vmatpush1.msra.mxu0 0.0
    %312 = vmatprep.subr.mxu0 0.0
    %313 = vmatpush1.msra.mxu0 0.0
    %314 = vmatprep.subr.mxu0 0.0
    %315 = vmatpush1.msra.mxu0 0.0
    %316 = vmatprep.subr.mxu0 0.0
    %317 = vmatpush1.msra.mxu0 0.0
    %318 = vmatprep.subr.mxu0 0.0
    %319 = vmatpush1.msra.mxu0 0.0
    %320 = vmatprep.subr.mxu0 0.0
    %321 = vmatpush1.msra.mxu0 0.0
    %322 = vmatprep.subr.mxu0 0.0
    %323 = vmatpush1.msra.mxu0 0.0
    %324 = vmatprep.subr.mxu0 0.0
    %325 = vmatpush1.msra.mxu0 0.0
    %326 = vmatprep.subr.mxu0 0.0
    %327 = vmatpush1.msra.mxu0 0.0
    %328 = vmatprep.subr.mxu0 0.0
    %329 = vmatpush1.msra.mxu0 0.0
    %330 = vmatprep.subr.mxu0 0.0
    %331 = vmatpush1.msra.mxu0 0.0
    %332 = vmatprep.subr.mxu0 0.0
    %333 = vmatpush1.msra.mxu0 0.0
    %334 = vmatprep.mubr.f32.mxu0 0.0
    %335 = vmatmul.mubr.f32.gmra.mrb[0].mxu0 %v268
    %v336 = vpop.f32.mrb[0].mxu0
    %v337 = vadd.f32 %v265, %v336
    %v338 = vpop.f32.mrb[0].mxu0
    %339 = vdwg.mxu0
    %vm340 = vcmask 58368
    %341 = vst.msk [vmem:[#allocation2] sm:$0x3] %vm340, %v337
    // Predicated region
    $region30: #{dqn_forward.1} parent=1 // pred_check
      _
    $region31: #{dqn_forward.1} parent=1 // pred_check_branch
      %343 = sbr.rel (0) target = $region33
    $region32: #{dqn_forward.1} parent=1 // pred_region
      %s345 = ssub.s32 32, 32
      %346 = vsyncadd [#allocation3], %s345
      %s348 = sshll.u32 [#allocation2], 4
      %s349 = int_to_ptr.vmem [resolvable:$true] %s348
      %351 = dma.vmem_to_hbm [thread:$0]  %s349, 32, %s7, [#allocation3]
    $region33: #{dqn_forward.1} parent=1 // pred_fallthru
      _
    // Predicated region
    $region34: #{dqn_forward.1} parent=1 // pred_check
      _
    $region35: #{dqn_forward.1} parent=1 // pred_check_branch
      %353 = sbr.rel (0) target = $region37
    $region36: #{dqn_forward.1} parent=1 // pred_region
      %354 = dma.done [#allocation3], 32
    $region37: #{dqn_forward.1} parent=1 // pred_fallthru
      _
    %355 = vsyncpa [#allocation3], 1

</llo_original>
